<compile_context>
chip_gen: v5e
topology: v5e:2x2
jax: 0.10.0
libtpu: 0.0.40
codegen_flags: <defaults>
</compile_context>

<pallas_src>
import functools

import jax
import jax.numpy as jnp
import numpy as np
from jax.experimental import pallas as pl
from jax.experimental.pallas import tpu as pltpu


def _round_up(x, m):
    return ((x + m - 1) // m) * m


def _mask_gather_mul_kernel(labels_sref, x_ref, w_hbm, out_ref, w_vmem, sem,
                            *, block_b):
    # labels_sref: (B_pad,) int32, SMEM (scalar-prefetched)
    # x_ref      : (block_b, A) VMEM tile of x
    # w_hbm      : (num_patches, A) weight table, left in HBM (pl.ANY)
    # out_ref    : (block_b, A) VMEM output tile
    # w_vmem     : (block_b, A) VMEM scratch for the gathered rows
    # sem        : (block_b,) DMA semaphores
    i = pl.program_id(0)
    base = i * block_b

    # Issue all row-gather DMAs for this batch tile (all in flight together).
    @pl.loop(0, block_b)
    def _start(r):
        row = labels_sref[base + r]
        pltpu.make_async_copy(
            w_hbm.at[pl.ds(row, 1), :],
            w_vmem.at[pl.ds(r, 1), :],
            sem.at[r],
        ).start()

    # Wait for all gathers (dummy src of identical shape gives the byte count).
    @pl.loop(0, block_b)
    def _wait(r):
        pltpu.make_async_copy(
            w_hbm.at[pl.ds(0, 1), :],
            w_vmem.at[pl.ds(r, 1), :],
            sem.at[r],
        ).wait()

    # Single VPU multiply for the whole tile: weight[labels] * x.
    out_ref[...] = (w_vmem[...] * x_ref[...]).astype(out_ref.dtype)


def actor_forward(x, labels, weight, *, block_b=128):
    """Pallas TPU equivalent of Actor.forward: weight[labels] * x."""
    B, A = x.shape
    num_patches, A_w = weight.shape
    assert A_w == A, "weight feature dim must match x"

    # Batch tile: fill the 8 sublanes, keep VMEM use O(block_b).
    tb = min(block_b, _round_up(B, 8))
    B_pad = _round_up(B, tb)

    labels_i32 = labels.astype(jnp.int32)
    if B_pad != B:
        # Only the batch axis is padded (to a tile multiple); the feature axis
        # and the weight table are never padded or copied.
        x_in = jnp.zeros((B_pad, A), x.dtype).at[:B].set(x)
        labels_in = jnp.zeros((B_pad,), jnp.int32).at[:B].set(labels_i32)
    else:
        x_in = x
        labels_in = labels_i32

    grid = (B_pad // tb,)

    # Explicit VMEM budget: double-buffered x/out tiles + gather scratch.
    # (Last dim is padded to the 128-lane width inside VMEM.)
    lane_bytes = tb * _round_up(A, 128) * 4
    vmem_limit = int(min(max(8 * lane_bytes + (1 << 20), 4 << 20), 64 << 20))

    grid_spec = pltpu.PrefetchScalarGridSpec(
        num_scalar_prefetch=1,                         # labels -> SMEM
        grid=grid,
        in_specs=[
            pl.BlockSpec((tb, A), lambda i, labels: (i, 0)),   # x batch tile
            pl.BlockSpec(memory_space=pl.ANY),                 # weight stays in HBM
        ],
        out_specs=pl.BlockSpec((tb, A), lambda i, labels: (i, 0)),
        scratch_shapes=[
            pltpu.VMEM((tb, A), weight.dtype),
            pltpu.SemaphoreType.DMA((tb,)),
        ],
    )

    out_p = pl.pallas_call(
        functools.partial(_mask_gather_mul_kernel, block_b=tb),
        out_shape=jax.ShapeDtypeStruct((B_pad, A), x.dtype),
        grid_spec=grid_spec,
        compiler_params=pltpu.CompilerParams(
            dimension_semantics=("parallel",),   # independent batch tiles
            vmem_limit_bytes=vmem_limit,
        ),
    )(labels_in, x_in, weight)

    return out_p[:B] if B_pad != B else out_p


if __name__ == "__main__":
    # Small deterministic shapes consistent with the module's forward:
    #   action_space = 10, num_patches = 64 (scaled-down table), batch = 10
    # (batch deliberately non-multiple of 8 to exercise the ragged last tile).
    action_space = 10
    num_patches = 64
    batch = 10

    key = jax.random.PRNGKey(0)
    kx, kl, kw = jax.random.split(key, 3)

    # Same init as Mask.__init__: fill(1 / action_space)
    weight = jnp.full((num_patches, action_space), 1.0 / action_space,
                      dtype=jnp.float32)

    x = jax.random.normal(kx, (batch, action_space), dtype=jnp.float32)
    labels = jax.random.randint(kl, (batch,), 0, num_patches, dtype=jnp.int32)

    out = actor_forward(x, labels, weight)
    out = jax.block_until_ready(out)

    # Reference (plain JAX) check of the PyTorch semantics: weight[labels] * x
    ref = weight[labels] * x
    np.testing.assert_allclose(np.asarray(out), np.asarray(ref),
                               rtol=1e-6, atol=1e-6)

    # Stricter gather check with a non-constant weight table (the module's
    # constant init would hide a wrong-row gather).
    weight_rand = jax.random.normal(kw, (num_patches, action_space),
                                    dtype=jnp.float32)
    out2 = jax.block_until_ready(actor_forward(x, labels, weight_rand))
    ref2 = weight_rand[labels] * x
    np.testing.assert_allclose(np.asarray(out2), np.asarray(ref2),
                               rtol=1e-6, atol=1e-6)

    print("KERNEL_OK")
</pallas_src>

<mosaic_0001>
module attributes {stable_mosaic.version = 11 : i64} {
  func.func @_mask_gather_mul_kernel(%arg0: i32, %arg1: memref<16xi32, #tpu.memory_space<smem>>, %arg2: memref<16x10xf32, #tpu.memory_space<vmem>>, %arg3: memref<64x10xf32, #tpu.memory_space<any>>, %arg4: memref<16x10xf32, #tpu.memory_space<vmem>>, %arg5: memref<16x10xf32, #tpu.memory_space<vmem>>, %arg6: memref<16x!tpu.dma_semaphore, #tpu.memory_space<semaphore_mem>>) attributes {dimension_semantics = [#tpu.dimension_semantics<parallel>], iteration_bounds = array<i64: 1>, scalar_prefetch = 1 : i64, scratch_operands = 2 : i64, tpu.core_type = #tpu.core_type<tc>, window_params = [{transform_indices = @transform_0, window_bounds = array<i64: 16, 10>}, {}, {transform_indices = @transform_2, window_bounds = array<i64: 16, 10>}]} {
    %c16_i32 = arith.constant 16 : i32
    %0 = arith.muli %arg0, %c16_i32 : i32
    %c0_i32 = arith.constant 0 : i32
    %c16_i32_0 = arith.constant 16 : i32
    %1 = arith.addi %c0_i32, %c16_i32_0 : i32
    %c1_i32 = arith.constant 1 : i32
    scf.for %arg7 = %c0_i32 to %1 step %c1_i32  : i32 {
      %c1_i32_11 = arith.constant 1 : i32
      %7 = arith.muli %arg7, %c1_i32_11 : i32
      %c0_i32_12 = arith.constant 0 : i32
      %8 = arith.addi %c0_i32_12, %7 : i32
      %9 = arith.addi %0, %8 : i32
      %10 = arith.index_cast %9 : i32 to index
      %11 = memref.load %arg1[%10] : memref<16xi32, #tpu.memory_space<smem>>
      %c0_i32_13 = arith.constant 0 : i32
      %12 = tpu.memref_slice %arg3[%11, %c0_i32_13] : memref<64x10xf32, #tpu.memory_space<any>> -> memref<1x10xf32, #tpu.memory_space<any>>
      %c0_i32_14 = arith.constant 0 : i32
      %13 = tpu.memref_slice %arg5[%8, %c0_i32_14] : memref<16x10xf32, #tpu.memory_space<vmem>> -> memref<1x10xf32, #tpu.memory_space<vmem>>
      %14 = tpu.memref_slice %arg6[%8] : memref<16x!tpu.dma_semaphore, #tpu.memory_space<semaphore_mem>> -> memref<1x!tpu.dma_semaphore, #tpu.memory_space<semaphore_mem>>
      %15 = tpu.memref_squeeze %14 : memref<1x!tpu.dma_semaphore, #tpu.memory_space<semaphore_mem>> -> memref<!tpu.dma_semaphore, #tpu.memory_space<semaphore_mem>>
      tpu.enqueue_dma source(%12 : memref<1x10xf32, #tpu.memory_space<any>>) target(%13 : memref<1x10xf32, #tpu.memory_space<vmem>>) target_semaphore(%15 : memref<!tpu.dma_semaphore, #tpu.memory_space<semaphore_mem>>)
    }
    %c16_i32_1 = arith.constant 16 : i32
    %c0_i32_2 = arith.constant 0 : i32
    %c16_i32_3 = arith.constant 16 : i32
    %2 = arith.addi %c0_i32_2, %c16_i32_3 : i32
    %c1_i32_4 = arith.constant 1 : i32
    scf.for %arg7 = %c0_i32_2 to %2 step %c1_i32_4  : i32 {
      %c1_i32_11 = arith.constant 1 : i32
      %7 = arith.muli %arg7, %c1_i32_11 : i32
      %c0_i32_12 = arith.constant 0 : i32
      %8 = arith.addi %c0_i32_12, %7 : i32
      %c0_i32_13 = arith.constant 0 : i32
      %c0_i32_14 = arith.constant 0 : i32
      %9 = tpu.memref_slice %arg3[%c0_i32_13, %c0_i32_14] : memref<64x10xf32, #tpu.memory_space<any>> -> memref<1x10xf32, #tpu.memory_space<any>>
      %c0_i32_15 = arith.constant 0 : i32
      %10 = tpu.memref_slice %arg5[%8, %c0_i32_15] : memref<16x10xf32, #tpu.memory_space<vmem>> -> memref<1x10xf32, #tpu.memory_space<vmem>>
      %11 = tpu.memref_slice %arg6[%8] : memref<16x!tpu.dma_semaphore, #tpu.memory_space<semaphore_mem>> -> memref<1x!tpu.dma_semaphore, #tpu.memory_space<semaphore_mem>>
      %12 = tpu.memref_squeeze %11 : memref<1x!tpu.dma_semaphore, #tpu.memory_space<semaphore_mem>> -> memref<!tpu.dma_semaphore, #tpu.memory_space<semaphore_mem>>
      tpu.wait_dma2 semaphore(%12 : memref<!tpu.dma_semaphore, #tpu.memory_space<semaphore_mem>>) src(%9 : memref<1x10xf32, #tpu.memory_space<any>>) dst(%10 : memref<1x10xf32, #tpu.memory_space<vmem>>)
    }
    %c16_i32_5 = arith.constant 16 : i32
    %c0 = arith.constant 0 : index
    %c0_6 = arith.constant 0 : index
    %3 = vector.load %arg5[%c0, %c0_6] : memref<16x10xf32, #tpu.memory_space<vmem>>, vector<16x10xf32>
    %c0_7 = arith.constant 0 : index
    %c0_8 = arith.constant 0 : index
    %4 = vector.load %arg2[%c0_7, %c0_8] : memref<16x10xf32, #tpu.memory_space<vmem>>, vector<16x10xf32>
    %5 = arith.mulf %3, %4 : vector<16x10xf32>
    %c0_9 = arith.constant 0 : index
    %c0_10 = arith.constant 0 : index
    %6 = vector.load %arg4[%c0_9, %c0_10] : memref<16x10xf32, #tpu.memory_space<vmem>>, vector<16x10xf32>
    tpu.vector_store %arg4[%c0_9, %c0_10], %5 {strides = array<i32>} : memref<16x10xf32, #tpu.memory_space<vmem>>, vector<16x10xf32>,
    return
  }
  func.func @transform_0(%arg0: i32, %arg1: memref<16xi32, #tpu.memory_space<smem>>) -> (i32, i32) {
    %c0_i32 = arith.constant 0 : i32
    %c0_i32_0 = arith.constant 0 : i32
    return %arg0, %c0_i32 : i32, i32
  }
  func.func @transform_2(%arg0: i32, %arg1: memref<16xi32, #tpu.memory_space<smem>>) -> (i32, i32) {
    %c0_i32 = arith.constant 0 : i32
    %c0_i32_0 = arith.constant 0 : i32
    return %arg0, %c0_i32 : i32, i32
  }
}

</mosaic_0001>

<llo_original>
// kernel: tpu_custom_call.1
$region0: #{tpu_custom_call.1}
  #allocation0 [shape = 'u32[]', space=smem, size = 0x4, offset = 0x4, fixed_abs, tag = 'smem constant byte address 0x4 - core index']
  #allocation1 [shape = 'u32[72,128]{1,0:T(1,128)}', space=vmem, size = 0x9000, scoped, tag = 'internal scratch']
  #allocation2 [shape = 'f32[16,10]{1,0:T(8,128)}', space=vmem, size = 0x2000, scoped, tag = 'scratch operand']
  #allocation3 [shape = 's32[16]{0}', space=sflag, size = 0x40, scoped, tag = 'scratch operand']
  #allocation4 [shape = 's32[1]{0}', space=sflag, size = 0x4, scoped, tag = 'scoped memory for tpu_custom_call.1']
  #allocation5 [shape = 'u8[512]{0}', space=smem, size = 0x200, scoped, tag = 'prefetched SMEM operand 0']
  #allocation8 [shape = 's32[]', space=sflag, size = 0x4, offset = 0, fixed_abs, tag = 'sflag constant byte address 0x0 - dummy sync flag']
  %s0 = inlined_call_operand.vmem [shape: s32[16], index: 0, kind: input, shape index: {}]
  %s1 = inlined_call_operand.vmem [shape: f32[16,10], index: 1, kind: input, shape index: {}]
  %s2 = inlined_call_operand.vmem [shape: f32[64,10], index: 2, kind: input, shape index: {}]
  %s3 = inlined_call_operand.hbm [shape: f32[16,10], index: 3, kind: output, shape index: {}]
  %s4 = sld [smem:[#allocation0]]
  $region58: #{tpu_custom_call.1} parent=0
    _
  %s6 = ssub.s32 1, %s4
  %s7 = scalar_select 0, %s6, %s4
  %s9 = sshll.u32 %s0, 4
  %s10 = int_to_ptr.vmem [resolvable:$true] %s9
  %12 = dma.vmem_to_smem %s10, 16, [#allocation5], [#allocation4]
  %14 = dma.done [#allocation4], 16
  %15 = sfence
  $region1: #{tpu_custom_call.1} parent=0
    #allocation6 [shape = 'u8[8192]{0}', space=vmem, size = 0x2000, scoped, tag = 'output window, operand 0, single buffered']
    #allocation7 [shape = 's32[1]{0}', space=sflag, size = 0x4, scoped, tag = 'scoped memory for tpu_custom_call.1']
    %16 = vsyncpa [#allocation7], 0
    // Predicated region
    $region2: #{tpu_custom_call.1} parent=1 // pred_check
      _
    $region3: #{tpu_custom_call.1} parent=1 // pred_check_branch
      %18 = sbr.rel (0) target = $region5
    $region4: #{tpu_custom_call.1} parent=1 // pred_region
      _
    $region5: #{tpu_custom_call.1} parent=1 // pred_fallthru
      _
    %s19 = smul.u32 0, 16
    loop: start=0, step=1, limit=16
    $region6: #{tpu_custom_call.1} parent=1 // loop_pre_header
      _
    $region7: #{tpu_custom_call.1} parent=1 // loop_header
      %s21 = sphi 0, %s25
      %p22 = scmp.ge.s32.totalorder %s21, 16
    $region8: #{tpu_custom_call.1} parent=1 // loop_header_branch
      %24 = sbr.rel (%p22) target = $region12
    $region9: #{tpu_custom_call.1} parent=1 // loop_body
      %s26 = sadd.s32 %s19, %s21
      %s27 = sld [smem:[#allocation5 + %s26]]
      %s28 = scalar_lea.vmem %s2, %s27
      %s29 = scalar_lea.vmem [#allocation2], %s21
      %s30 = scalar_lea.sflag [#allocation3], %s21
      // Predicated region
      $region13: #{tpu_custom_call.1} parent=9 // pred_check
        _
      $region14: #{tpu_custom_call.1} parent=9 // pred_check_branch
        %32 = sbr.rel target = $region16
      $region15: #{tpu_custom_call.1} parent=9 // pred_region
        // Predicated region
        $region28: #{tpu_custom_call.1} parent=15 // pred_check
          _
        $region29: #{tpu_custom_call.1} parent=15 // pred_check_branch
          %48 = sbr.rel (0) target = $region31
        $region30: #{tpu_custom_call.1} parent=15 // pred_region
          %s50 = ssub.s32 2, 1
          loop: start=0, step=1, limit=1
          $region32: #{tpu_custom_call.1} parent=30 // loop_pre_header
            _
          $region33: #{tpu_custom_call.1} parent=30 // loop_header
            %s52 = sphi 0, %s56
            %p53 = scmp.ge.s32.totalorder %s52, 1
            %s57 = sphi %s28, %s28
            %s58 = sphi %s29, %s29
          $region34: #{tpu_custom_call.1} parent=30 // loop_header_branch
            %55 = sbr.rel (%p53) target = $region38
          $region35: #{tpu_custom_call.1} parent=30 // loop_body
            %v59 = vld [vmem:[%s57] sm:%s50]
            %60 = vst [vmem:[%s58] sm:%s50] %v59
          $region36: #{tpu_custom_call.1} parent=30 // loop_footer
            %s56 = sadd.s32 1, %s52
          $region37: #{tpu_custom_call.1} parent=30 // loop_footer_branch
            %51 = sbr.rel target = $region33
          $region38: #{tpu_custom_call.1} parent=30 // loop_exit
            _
        $region31: #{tpu_custom_call.1} parent=15 // pred_fallthru
          _
      $region16: #{tpu_custom_call.1} parent=9 // pred_fallthru
        _
      // Predicated region
      $region17: #{tpu_custom_call.1} parent=9 // pred_check
        _
      $region18: #{tpu_custom_call.1} parent=9 // pred_check_branch
        %34 = sbr.rel (0) target = $region20
      $region19: #{tpu_custom_call.1} parent=9 // pred_region
        %s36 = ssub.s32 2, 1
        loop: start=0, step=1, limit=1
        $region21: #{tpu_custom_call.1} parent=19 // loop_pre_header
          _
        $region22: #{tpu_custom_call.1} parent=19 // loop_header
          %s38 = sphi 0, %s42
          %p39 = scmp.ge.s32.totalorder %s38, 1
          %s43 = sphi %s28, %s28
          %s44 = sphi %s29, %s29
        $region23: #{tpu_custom_call.1} parent=19 // loop_header_branch
          %41 = sbr.rel (%p39) target = $region27
        $region24: #{tpu_custom_call.1} parent=19 // loop_body
          %v45 = vld [vmem:[%s43] sm:%s36]
          %46 = vst [vmem:[%s44] sm:%s36] %v45
        $region25: #{tpu_custom_call.1} parent=19 // loop_footer
          %s42 = sadd.s32 1, %s38
        $region26: #{tpu_custom_call.1} parent=19 // loop_footer_branch
          %37 = sbr.rel target = $region22
        $region27: #{tpu_custom_call.1} parent=19 // loop_exit
          _
      $region20: #{tpu_custom_call.1} parent=9 // pred_fallthru
        _
      // Predicated region
      $region39: #{tpu_custom_call.1} parent=9 // pred_check
        _
      $region40: #{tpu_custom_call.1} parent=9 // pred_check_branch
        %63 = sbr.rel (0) target = $region42
      $region41: #{tpu_custom_call.1} parent=9 // pred_region
        %64 = vsyncadd %s30, 16
      $region42: #{tpu_custom_call.1} parent=9 // pred_fallthru
        _
    $region10: #{tpu_custom_call.1} parent=1 // loop_footer
      %s25 = sadd.s32 1, %s21
    $region11: #{tpu_custom_call.1} parent=1 // loop_footer_branch
      %20 = sbr.rel target = $region7
    $region12: #{tpu_custom_call.1} parent=1 // loop_exit
      _
    loop: start=0, step=1, limit=16
    $region43: #{tpu_custom_call.1} parent=1 // loop_pre_header
      _
    $region44: #{tpu_custom_call.1} parent=1 // loop_header
      %s66 = sphi 0, %s70
      %p67 = scmp.ge.s32.totalorder %s66, 16
    $region45: #{tpu_custom_call.1} parent=1 // loop_header_branch
      %69 = sbr.rel (%p67) target = $region49
    $region46: #{tpu_custom_call.1} parent=1 // loop_body
      %s71 = scalar_lea.sflag [#allocation3], %s66
      %s72 = smul.u32 1, 1
      %s73 = sshll.u32 %s72, 4
      %74 = dma.done %s71, %s73
    $region47: #{tpu_custom_call.1} parent=1 // loop_footer
      %s70 = sadd.s32 1, %s66
    $region48: #{tpu_custom_call.1} parent=1 // loop_footer_branch
      %65 = sbr.rel target = $region44
    $region49: #{tpu_custom_call.1} parent=1 // loop_exit
      _
    %v75 = vld [vmem:[#allocation2] sm:$0xff]
    %v76 = vld [vmem:[#allocation2 + $0x8] sm:$0xff]
    %v77 = vld [vmem:[%s1] sm:$0xff]
    %v78 = vld [vmem:[%s1 + $0x8] sm:$0xff]
    %v79 = vmul.f32 %v75, %v77
    %v80 = vmul.f32 %v76, %v78
    %vm81 = vcmask 80896
    %82 = vst.msk [vmem:[#allocation6] sm:$0xff] %vm81, %v79
    %83 = vst.msk [vmem:[#allocation6 + $0x8] sm:$0xff] %vm81, %v80
    // Predicated region
    $region50: #{tpu_custom_call.1} parent=1 // pred_check
      _
    $region51: #{tpu_custom_call.1} parent=1 // pred_check_branch
      %85 = sbr.rel (0) target = $region53
    $region52: #{tpu_custom_call.1} parent=1 // pred_region
      %87 = vsyncadd [#allocation7], 0
      %s88 = sshll.u32 [#allocation6], 4
      %s89 = int_to_ptr.vmem [resolvable:$true] %s88
      %s90 = sshll.u32 %s3, 4
      %s91 = int_to_ptr.hbm [resolvable:$true] %s90
      %96 = dma.vmem_to_hbm [thread:$0]  %s89, 256, %s91, [#allocation7], 128, 128, 8
    $region53: #{tpu_custom_call.1} parent=1 // pred_fallthru
      _
    // Predicated region
    $region54: #{tpu_custom_call.1} parent=1 // pred_check
      _
    $region55: #{tpu_custom_call.1} parent=1 // pred_check_branch
      %98 = sbr.rel (0) target = $region57
    $region56: #{tpu_custom_call.1} parent=1 // pred_region
      %100 = dma.done [#allocation7], 256
    $region57: #{tpu_custom_call.1} parent=1 // pred_fallthru
      _
    %101 = vsyncpa [#allocation7], 1
  %102 = vsyncmov [#allocation3]
  %s103 = vpop.sfrf %102
  %p104 = scmp.eq.s32.totalorder %s103, 0
  %p105 = pneg %p104
  %107 = shalt.err (%p105)
  %s108 = scalar_lea.sflag [#allocation3], 1
  %109 = vsyncmov %s108
  %s110 = vpop.sfrf %109
  %p111 = scmp.eq.s32.totalorder %s110, 0
  %p112 = pneg %p111
  %114 = shalt.err (%p112)
  %s115 = scalar_lea.sflag [#allocation3], 2
  %116 = vsyncmov %s115
  %s117 = vpop.sfrf %116
  %p118 = scmp.eq.s32.totalorder %s117, 0
  %p119 = pneg %p118
  %121 = shalt.err (%p119)
  %s122 = scalar_lea.sflag [#allocation3], 3
  %123 = vsyncmov %s122
  %s124 = vpop.sfrf %123
  %p125 = scmp.eq.s32.totalorder %s124, 0
  %p126 = pneg %p125
  %128 = shalt.err (%p126)
  %s129 = scalar_lea.sflag [#allocation3], 4
  %130 = vsyncmov %s129
  %s131 = vpop.sfrf %130
  %p132 = scmp.eq.s32.totalorder %s131, 0
  %p133 = pneg %p132
  %135 = shalt.err (%p133)
  %s136 = scalar_lea.sflag [#allocation3], 5
  %137 = vsyncmov %s136
  %s138 = vpop.sfrf %137
  %p139 = scmp.eq.s32.totalorder %s138, 0
  %p140 = pneg %p139
  %142 = shalt.err (%p140)
  %s143 = scalar_lea.sflag [#allocation3], 6
  %144 = vsyncmov %s143
  %s145 = vpop.sfrf %144
  %p146 = scmp.eq.s32.totalorder %s145, 0
  %p147 = pneg %p146
  %149 = shalt.err (%p147)
  %s150 = scalar_lea.sflag [#allocation3], 7
  %151 = vsyncmov %s150
  %s152 = vpop.sfrf %151
  %p153 = scmp.eq.s32.totalorder %s152, 0
  %p154 = pneg %p153
  %156 = shalt.err (%p154)
  %s157 = scalar_lea.sflag [#allocation3], 8
  %158 = vsyncmov %s157
  %s159 = vpop.sfrf %158
  %p160 = scmp.eq.s32.totalorder %s159, 0
  %p161 = pneg %p160
  %163 = shalt.err (%p161)
  %s164 = scalar_lea.sflag [#allocation3], 9
  %165 = vsyncmov %s164
  %s166 = vpop.sfrf %165
  %p167 = scmp.eq.s32.totalorder %s166, 0
  %p168 = pneg %p167
  %170 = shalt.err (%p168)
  %s171 = scalar_lea.sflag [#allocation3], 10
  %172 = vsyncmov %s171
  %s173 = vpop.sfrf %172
  %p174 = scmp.eq.s32.totalorder %s173, 0
  %p175 = pneg %p174
  %177 = shalt.err (%p175)
  %s178 = scalar_lea.sflag [#allocation3], 11
  %179 = vsyncmov %s178
  %s180 = vpop.sfrf %179
  %p181 = scmp.eq.s32.totalorder %s180, 0
  %p182 = pneg %p181
  %184 = shalt.err (%p182)
  %s185 = scalar_lea.sflag [#allocation3], 12
  %186 = vsyncmov %s185
  %s187 = vpop.sfrf %186
  %p188 = scmp.eq.s32.totalorder %s187, 0
  %p189 = pneg %p188
  %191 = shalt.err (%p189)
  %s192 = scalar_lea.sflag [#allocation3], 13
  %193 = vsyncmov %s192
  %s194 = vpop.sfrf %193
  %p195 = scmp.eq.s32.totalorder %s194, 0
  %p196 = pneg %p195
  %198 = shalt.err (%p196)
  %s199 = scalar_lea.sflag [#allocation3], 14
  %200 = vsyncmov %s199
  %s201 = vpop.sfrf %200
  %p202 = scmp.eq.s32.totalorder %s201, 0
  %p203 = pneg %p202
  %205 = shalt.err (%p203)
  %s206 = scalar_lea.sflag [#allocation3], 15
  %207 = vsyncmov %s206
  %s208 = vpop.sfrf %207
  %p209 = scmp.eq.s32.totalorder %s208, 0
  %p210 = pneg %p209
  %212 = shalt.err (%p210)

</llo_original>
